<compile_context>
chip_gen: v5e
topology: v5e:2x2
jax: 0.10.0
libtpu: 0.0.40
codegen_flags: <defaults>
</compile_context>

<pallas_src>
import functools

import jax
import jax.numpy as jnp
import numpy as np
from jax.experimental import pallas as pl
from jax.experimental.pallas import tpu as pltpu

LANE = 128        # boxes per lane group
SUBLANE = 8       # sublane tile
R_TARGET = 64     # lane groups per grid step -> 64*128 = 8192 boxes / step


def _compute_loss(box_ref, *, mode, eps, loss_weight):
    """box_ref: (8, R, 128) block. Returns per-box loss, shape (R, 128)."""
    px1 = box_ref[0]
    py1 = box_ref[1]
    px2 = box_ref[2]
    py2 = box_ref[3]
    tx1 = box_ref[4]
    ty1 = box_ref[5]
    tx2 = box_ref[6]
    ty2 = box_ref[7]

    # Aligned bbox_overlaps (IoU).
    lt_x = jnp.maximum(px1, tx1)
    lt_y = jnp.maximum(py1, ty1)
    rb_x = jnp.minimum(px2, tx2)
    rb_y = jnp.minimum(py2, ty2)
    w = jnp.maximum(rb_x - lt_x, 0.0)
    h = jnp.maximum(rb_y - lt_y, 0.0)
    overlap = w * h

    area_p = (px2 - px1) * (py2 - py1)
    area_t = (tx2 - tx1) * (ty2 - ty1)
    union = jnp.maximum(area_p + area_t - overlap, eps)   # bbox_overlaps eps clamp
    ious = jnp.maximum(overlap / union, eps)               # .clamp(min=eps)

    if mode == 'linear':
        loss = 1.0 - ious
    elif mode == 'square':
        loss = 1.0 - ious * ious
    elif mode == 'log':
        loss = -jnp.log(ious)                               # EUP path
    else:
        raise NotImplementedError(mode)

    if loss_weight != 1.0:
        loss = loss_weight * loss
    return loss


def _iou_loss_per_kernel(box_ref, loss_ref, *, mode, eps, loss_weight):
    """reduction='none': write per-box loss block (R, 128)."""
    loss_ref[...] = _compute_loss(box_ref, mode=mode, eps=eps,
                                  loss_weight=loss_weight)


def _iou_loss_sum_kernel(box_ref, psum_ref, *, mode, eps, loss_weight, r):
    """reduction='sum'/'mean': write per-step (8,128) per-lane partial sums."""
    loss = _compute_loss(box_ref, mode=mode, eps=eps, loss_weight=loss_weight)
    # Fold (R,128) -> (8,128) with R//8 unrolled vector adds (no XLU work,
    # no masked scalar stores). Final cross-lane reduce happens in the wrapper.
    partial = loss[0:SUBLANE, :]
    for k in range(1, r // SUBLANE):
        partial = partial + loss[k * SUBLANE:(k + 1) * SUBLANE, :]
    psum_ref[0] = partial


def _pack_boxes(pred, target, n, n_pad, n_blocks_pad):
    """Single fused pad + transpose + reshape into (8, n_blocks_pad, 128)."""
    boxes = jnp.concatenate(
        [pred.astype(jnp.float32), target.astype(jnp.float32)], axis=1)  # (n, 8)
    # Pad with identical unit boxes: IoU == 1 -> loss == 0 in all modes.
    pad_box = jnp.array([0., 0., 1., 1., 0., 0., 1., 1.], jnp.float32)
    pad = jnp.broadcast_to(pad_box, (n_pad - n, 8))
    packed = jnp.concatenate([boxes, pad], axis=0).T           # (8, n_pad)
    return packed.reshape(8, n_blocks_pad, LANE)


def iou_loss_pallas(pred, target, *, mode='log', eps=1e-6,
                    loss_weight=1.0, reduction='mean'):
    """JAX/Pallas equivalent of IoULoss(...)(pred, target) with weight=None.

    pred, target: (n, 4) arrays of (x1, y1, x2, y2).
    """
    assert mode in ('linear', 'square', 'log')
    assert reduction in ('none', 'mean', 'sum')
    n = pred.shape[0]

    n_blocks = -(-n // LANE)                                   # ceil(n/128)
    n_blocks8 = ((n_blocks + SUBLANE - 1) // SUBLANE) * SUBLANE
    r = min(R_TARGET, n_blocks8)                               # multiple of 8
    n_blocks_pad = ((n_blocks + r - 1) // r) * r
    n_pad = n_blocks_pad * LANE
    grid = n_blocks_pad // r

    packed = _pack_boxes(pred, target, n, n_pad, n_blocks_pad)
    in_spec = pl.BlockSpec((8, r, LANE), lambda i: (0, i, 0))

    if reduction == 'none':
        kernel = functools.partial(_iou_loss_per_kernel, mode=mode, eps=eps,
                                   loss_weight=loss_weight)
        loss_per = pl.pallas_call(
            kernel,
            out_shape=jax.ShapeDtypeStruct((n_blocks_pad, LANE), jnp.float32),
            grid_spec=pltpu.PrefetchScalarGridSpec(
                num_scalar_prefetch=0,
                grid=(grid,),
                in_specs=[in_spec],
                out_specs=pl.BlockSpec((r, LANE), lambda i: (i, 0)),
            ),
            compiler_params=pltpu.CompilerParams(
                dimension_semantics=("parallel",)),
        )(packed)
        return loss_per.reshape(-1)[:n]

    # 'sum' / 'mean': only per-step partial sums leave the kernel.
    kernel = functools.partial(_iou_loss_sum_kernel, mode=mode, eps=eps,
                               loss_weight=loss_weight, r=r)
    psums = pl.pallas_call(
        kernel,
        out_shape=jax.ShapeDtypeStruct((grid, SUBLANE, LANE), jnp.float32),
        grid_spec=pltpu.PrefetchScalarGridSpec(
            num_scalar_prefetch=0,
            grid=(grid,),
            in_specs=[in_spec],
            out_specs=pl.BlockSpec((1, SUBLANE, LANE), lambda i: (i, 0, 0)),
        ),
        compiler_params=pltpu.CompilerParams(
            dimension_semantics=("parallel",)),
    )(packed)

    total = jnp.sum(psums)
    if reduction == 'sum':
        return total
    # 'mean' with weight=None, avg_factor=None -> plain mean over n boxes.
    return total / jnp.float32(n)


def _iou_loss_ref(pred, target, mode='log', eps=1e-6, loss_weight=1.0,
                  reduction='mean'):
    """Pure-JAX reference (mirrors the PyTorch module) for verification."""
    pred = pred.astype(jnp.float32)
    target = target.astype(jnp.float32)
    lt = jnp.maximum(pred[:, :2], target[:, :2])
    rb = jnp.minimum(pred[:, 2:], target[:, 2:])
    wh = jnp.maximum(rb - lt, 0.0)
    overlap = wh[:, 0] * wh[:, 1]
    ap = (pred[:, 2] - pred[:, 0]) * (pred[:, 3] - pred[:, 1])
    at = (target[:, 2] - target[:, 0]) * (target[:, 3] - target[:, 1])
    union = jnp.maximum(ap + at - overlap, eps)
    ious = jnp.maximum(overlap / union, eps)
    if mode == 'linear':
        loss = 1.0 - ious
    elif mode == 'square':
        loss = 1.0 - ious ** 2
    else:
        loss = -jnp.log(ious)
    loss = loss_weight * loss
    if reduction == 'none':
        return loss
    if reduction == 'sum':
        return jnp.sum(loss)
    return jnp.mean(loss)


if __name__ == "__main__":
    key = jax.random.PRNGKey(0)
    k1, k2, k3, k4 = jax.random.split(key, 4)

    n = 8  # number of boxes
    # Build well-formed (x1, y1, x2, y2) boxes: x2 > x1, y2 > y1.
    p_xy = jax.random.uniform(k1, (n, 2), minval=0.0, maxval=10.0)
    p_wh = jax.random.uniform(k2, (n, 2), minval=1.0, maxval=5.0)
    pred = jnp.concatenate([p_xy, p_xy + p_wh], axis=1)          # (n, 4)

    t_xy = p_xy + jax.random.uniform(k3, (n, 2), minval=-1.0, maxval=1.0)
    t_wh = p_wh + jax.random.uniform(k4, (n, 2), minval=-0.5, maxval=0.5)
    target = jnp.concatenate([t_xy, t_xy + jnp.maximum(t_wh, 0.5)], axis=1)

    # Default config: mode='log', reduction='mean', loss_weight=1.0.
    out_mean = jax.block_until_ready(
        iou_loss_pallas(pred, target, mode='log', eps=1e-6,
                        loss_weight=1.0, reduction='mean'))
    ref_mean = jax.block_until_ready(
        _iou_loss_ref(pred, target, mode='log', reduction='mean'))
    np.testing.assert_allclose(np.asarray(out_mean), np.asarray(ref_mean),
                               rtol=1e-5, atol=1e-6)

    # Also exercise the per-box path and another mode.
    out_none = jax.block_until_ready(
        iou_loss_pallas(pred, target, mode='linear', reduction='none'))
    ref_none = jax.block_until_ready(
        _iou_loss_ref(pred, target, mode='linear', reduction='none'))
    np.testing.assert_allclose(np.asarray(out_none), np.asarray(ref_none),
                               rtol=1e-5, atol=1e-6)

    out_sum = jax.block_until_ready(
        iou_loss_pallas(pred, target, mode='square', reduction='sum'))
    ref_sum = jax.block_until_ready(
        _iou_loss_ref(pred, target, mode='square', reduction='sum'))
    np.testing.assert_allclose(np.asarray(out_sum), np.asarray(ref_sum),
                               rtol=1e-5, atol=1e-6)

    print("KERNEL_OK")
</pallas_src>

<mosaic_0001>
module attributes {stable_mosaic.version = 11 : i64} {
  func.func @_iou_loss_sum_kernel(%arg0: i32, %arg1: memref<8x8x128xf32, #tpu.memory_space<vmem>>, %arg2: memref<1x8x128xf32, #tpu.memory_space<vmem>>) attributes {dimension_semantics = [#tpu.dimension_semantics<parallel>], iteration_bounds = array<i64: 1>, scalar_prefetch = 0 : i64, scratch_operands = 0 : i64, tpu.core_type = #tpu.core_type<tc>, window_params = [{transform_indices = @transform_0, window_bounds = array<i64: 8, 8, 128>}, {transform_indices = @transform_1, window_bounds = array<i64: 1, 8, 128>}]} {
    %c0 = arith.constant 0 : index
    %c0_0 = arith.constant 0 : index
    %c0_1 = arith.constant 0 : index
    %0 = vector.load %arg1[%c0, %c0_0, %c0_1] : memref<8x8x128xf32, #tpu.memory_space<vmem>>, vector<1x8x128xf32>
    %1 = vector.shape_cast %0 : vector<1x8x128xf32> to vector<8x128xf32>
    %c1 = arith.constant 1 : index
    %c0_2 = arith.constant 0 : index
    %c0_3 = arith.constant 0 : index
    %2 = vector.load %arg1[%c1, %c0_2, %c0_3] : memref<8x8x128xf32, #tpu.memory_space<vmem>>, vector<1x8x128xf32>
    %3 = vector.shape_cast %2 : vector<1x8x128xf32> to vector<8x128xf32>
    %c2 = arith.constant 2 : index
    %c0_4 = arith.constant 0 : index
    %c0_5 = arith.constant 0 : index
    %4 = vector.load %arg1[%c2, %c0_4, %c0_5] : memref<8x8x128xf32, #tpu.memory_space<vmem>>, vector<1x8x128xf32>
    %5 = vector.shape_cast %4 : vector<1x8x128xf32> to vector<8x128xf32>
    %c3 = arith.constant 3 : index
    %c0_6 = arith.constant 0 : index
    %c0_7 = arith.constant 0 : index
    %6 = vector.load %arg1[%c3, %c0_6, %c0_7] : memref<8x8x128xf32, #tpu.memory_space<vmem>>, vector<1x8x128xf32>
    %7 = vector.shape_cast %6 : vector<1x8x128xf32> to vector<8x128xf32>
    %c4 = arith.constant 4 : index
    %c0_8 = arith.constant 0 : index
    %c0_9 = arith.constant 0 : index
    %8 = vector.load %arg1[%c4, %c0_8, %c0_9] : memref<8x8x128xf32, #tpu.memory_space<vmem>>, vector<1x8x128xf32>
    %9 = vector.shape_cast %8 : vector<1x8x128xf32> to vector<8x128xf32>
    %c5 = arith.constant 5 : index
    %c0_10 = arith.constant 0 : index
    %c0_11 = arith.constant 0 : index
    %10 = vector.load %arg1[%c5, %c0_10, %c0_11] : memref<8x8x128xf32, #tpu.memory_space<vmem>>, vector<1x8x128xf32>
    %11 = vector.shape_cast %10 : vector<1x8x128xf32> to vector<8x128xf32>
    %c6 = arith.constant 6 : index
    %c0_12 = arith.constant 0 : index
    %c0_13 = arith.constant 0 : index
    %12 = vector.load %arg1[%c6, %c0_12, %c0_13] : memref<8x8x128xf32, #tpu.memory_space<vmem>>, vector<1x8x128xf32>
    %13 = vector.shape_cast %12 : vector<1x8x128xf32> to vector<8x128xf32>
    %c7 = arith.constant 7 : index
    %c0_14 = arith.constant 0 : index
    %c0_15 = arith.constant 0 : index
    %14 = vector.load %arg1[%c7, %c0_14, %c0_15] : memref<8x8x128xf32, #tpu.memory_space<vmem>>, vector<1x8x128xf32>
    %15 = vector.shape_cast %14 : vector<1x8x128xf32> to vector<8x128xf32>
    %16 = arith.maximumf %1, %9 : vector<8x128xf32>
    %17 = arith.maximumf %3, %11 : vector<8x128xf32>
    %18 = arith.minimumf %5, %13 : vector<8x128xf32>
    %19 = arith.minimumf %7, %15 : vector<8x128xf32>
    %20 = arith.subf %18, %16 : vector<8x128xf32>
    %cst = arith.constant 0.000000e+00 : f32
    %21 = vector.broadcast %cst : f32 to vector<8x128xf32>
    %22 = arith.maximumf %20, %21 : vector<8x128xf32>
    %23 = arith.subf %19, %17 : vector<8x128xf32>
    %cst_16 = arith.constant 0.000000e+00 : f32
    %24 = vector.broadcast %cst_16 : f32 to vector<8x128xf32>
    %25 = arith.maximumf %23, %24 : vector<8x128xf32>
    %26 = arith.mulf %22, %25 : vector<8x128xf32>
    %27 = arith.subf %5, %1 : vector<8x128xf32>
    %28 = arith.subf %7, %3 : vector<8x128xf32>
    %29 = arith.mulf %27, %28 : vector<8x128xf32>
    %30 = arith.subf %13, %9 : vector<8x128xf32>
    %31 = arith.subf %15, %11 : vector<8x128xf32>
    %32 = arith.mulf %30, %31 : vector<8x128xf32>
    %33 = arith.addf %29, %32 : vector<8x128xf32>
    %34 = arith.subf %33, %26 : vector<8x128xf32>
    %cst_17 = arith.constant 9.99999997E-7 : f32
    %35 = vector.broadcast %cst_17 : f32 to vector<8x128xf32>
    %36 = arith.maximumf %34, %35 : vector<8x128xf32>
    %37 = arith.divf %26, %36 : vector<8x128xf32>
    %cst_18 = arith.constant 9.99999997E-7 : f32
    %38 = vector.broadcast %cst_18 : f32 to vector<8x128xf32>
    %39 = arith.maximumf %37, %38 : vector<8x128xf32>
    %40 = math.log %39 : vector<8x128xf32>
    %cst_19 = arith.constant 0.000000e+00 : f32
    %41 = vector.broadcast %cst_19 : f32 to vector<8x128xf32>
    %42 = arith.subf %41, %40 : vector<8x128xf32>
    %c0_20 = arith.constant 0 : index
    %c0_21 = arith.constant 0 : index
    %c0_22 = arith.constant 0 : index
    %43 = vector.load %arg2[%c0_20, %c0_21, %c0_22] : memref<1x8x128xf32, #tpu.memory_space<vmem>>, vector<1x8x128xf32>
    %44 = vector.shape_cast %43 : vector<1x8x128xf32> to vector<8x128xf32>
    %45 = vector.shape_cast %42 : vector<8x128xf32> to vector<1x8x128xf32>
    tpu.vector_store %arg2[%c0_20, %c0_21, %c0_22], %45 {strides = array<i32>} : memref<1x8x128xf32, #tpu.memory_space<vmem>>, vector<1x8x128xf32>,
    return
  }
  func.func @transform_0(%arg0: i32) -> (i32, i32, i32) {
    %c0_i32 = arith.constant 0 : i32
    %c0_i32_0 = arith.constant 0 : i32
    %c0_i32_1 = arith.constant 0 : i32
    return %c0_i32, %arg0, %c0_i32_0 : i32, i32, i32
  }
  func.func @transform_1(%arg0: i32) -> (i32, i32, i32) {
    %c0_i32 = arith.constant 0 : i32
    %c0_i32_0 = arith.constant 0 : i32
    %c0_i32_1 = arith.constant 0 : i32
    return %arg0, %c0_i32, %c0_i32_0 : i32, i32, i32
  }
}

</mosaic_0001>

<llo_original>
// kernel: tpu_custom_call.1
$region0: #{tpu_custom_call.1}
  #allocation0 [shape = 'u32[]', space=smem, size = 0x4, offset = 0x4, fixed_abs, tag = 'smem constant byte address 0x4 - core index']
  #allocation1 [shape = 'u32[72,128]{1,0:T(1,128)}', space=vmem, size = 0x9000, scoped, tag = 'internal scratch']
  %s0 = inlined_call_operand.hbm [shape: f32[8,8,128], index: 0, kind: input, shape index: {}]
  %s1 = inlined_call_operand.hbm [shape: f32[1,8,128], index: 1, kind: output, shape index: {}]
  %s2 = sld [smem:[#allocation0]]
  $region18: #{tpu_custom_call.1} parent=0
    _
  %s4 = ssub.s32 1, %s2
  %s5 = scalar_select 0, %s4, %s2
  $region1: #{tpu_custom_call.1} parent=0
    #allocation2 [shape = 'u8[32768]{0}', space=vmem, size = 0x8000, scoped, tag = 'input window, operand 0, single buffered']
    #allocation3 [shape = 's32[1]{0}', space=sflag, size = 0x4, scoped, tag = 'scoped memory for tpu_custom_call.1']
    #allocation4 [shape = 's32[1]{0}', space=sflag, size = 0x4, scoped, tag = 'scoped memory for tpu_custom_call.1']
    #allocation5 [shape = 'u8[4096]{0}', space=vmem, size = 0x1000, scoped, tag = 'output window, operand 0, single buffered']
    %6 = vsyncpa [#allocation3], 0
    %7 = vsyncpa [#allocation4], 0
    // Predicated region
    $region2: #{tpu_custom_call.1} parent=1 // pred_check
      _
    $region3: #{tpu_custom_call.1} parent=1 // pred_check_branch
      %9 = sbr.rel (0) target = $region5
    $region4: #{tpu_custom_call.1} parent=1 // pred_region
      %11 = vsyncadd [#allocation3], 0
      %s12 = sshll.u32 %s0, 4
      %s13 = int_to_ptr.hbm [resolvable:$true] %s12
      %s14 = sshll.u32 [#allocation2], 4
      %s15 = int_to_ptr.vmem [resolvable:$true] %s14
      %20 = dma.hbm_to_vmem [thread:$0]  %s13, 1024, %s15, [#allocation3], 128, 128, 8
    $region5: #{tpu_custom_call.1} parent=1 // pred_fallthru
      _
    // Predicated region
    $region6: #{tpu_custom_call.1} parent=1 // pred_check
      _
    $region7: #{tpu_custom_call.1} parent=1 // pred_check_branch
      %22 = sbr.rel (0) target = $region9
    $region8: #{tpu_custom_call.1} parent=1 // pred_region
      %24 = dma.done [#allocation3], 1024
    $region9: #{tpu_custom_call.1} parent=1 // pred_fallthru
      _
    %v25 = vld [vmem:[#allocation2] sm:$0xff]
    %s26 = scalar_lea.vmem [#allocation2], 8
    %v27 = vld [vmem:[%s26] sm:$0xff]
    %s28 = scalar_lea.vmem [#allocation2], 16
    %v29 = vld [vmem:[%s28] sm:$0xff]
    %s30 = scalar_lea.vmem [#allocation2], 24
    %v31 = vld [vmem:[%s30] sm:$0xff]
    %s32 = scalar_lea.vmem [#allocation2], 32
    %v33 = vld [vmem:[%s32] sm:$0xff]
    %s34 = scalar_lea.vmem [#allocation2], 40
    %v35 = vld [vmem:[%s34] sm:$0xff]
    %s36 = scalar_lea.vmem [#allocation2], 48
    %v37 = vld [vmem:[%s36] sm:$0xff]
    %s38 = scalar_lea.vmem [#allocation2], 56
    %v39 = vld [vmem:[%s38] sm:$0xff]
    %v40 = vmax.f32 %v25, %v33
    %v41 = vmax.f32 %v27, %v35
    %v42 = vmin.f32 %v29, %v37
    %v43 = vmin.f32 %v31, %v39
    %v44 = vsub.f32 %v42, %v40
    %v45 = vmax.f32 %v44, 0.0
    %v46 = vsub.f32 %v43, %v41
    %v47 = vmax.f32 %v46, 0.0
    %v48 = vmul.f32 %v45, %v47
    %v49 = vsub.f32 %v29, %v25
    %v50 = vsub.f32 %v31, %v27
    %v51 = vmul.f32 %v49, %v50
    %v52 = vsub.f32 %v37, %v33
    %v53 = vsub.f32 %v39, %v35
    %v54 = vmul.f32 %v52, %v53
    %v55 = vadd.f32 %v51, %v54
    %v56 = vsub.f32 %v55, %v48
    %v57 = vmax.f32 %v56, 1e-06
    %v58 = vrcp.pop %v57
    %v59 = vmul.f32 %v57, %v58
    %v60 = vsub.f32 1.0, %v59
    %v61 = vmul.f32 %v58, %v60
    %v62 = vadd.f32 %v58, %v61
    %vm63 = vweird.f32 %v57
    %vm64 = vweird.f32 %v58
    %vm65 = vmor %vm63, %vm64
    %v66 = vsel %vm65, %v58, %v62
    %v67 = vand.u32 2147483647, %v57
    %vm68 = vcmp.eq.f32.partialorder %v67, 8.507059e+37
    %v69 = vand.u32 %v57, 2147483648
    %v70 = vor.u32 1.1754944e-38, %v69
    %v71 = vsel %vm68, %v70, %v66
    %v72 = vmul.f32 %v48, %v71
    %v73 = vmax.f32 %v72, 1e-06
    %v74 = vlog2.pop %v73
    %v75 = vmul.f32 %v74, 0.6931472
    %v76 = vsub.f32 0.0, %v75
    %77 = vst [vmem:[#allocation5] sm:$0xff] %v76
    // Predicated region
    $region10: #{tpu_custom_call.1} parent=1 // pred_check
      _
    $region11: #{tpu_custom_call.1} parent=1 // pred_check_branch
      %79 = sbr.rel (0) target = $region13
    $region12: #{tpu_custom_call.1} parent=1 // pred_region
      %81 = vsyncadd [#allocation4], 0
      %s83 = sshll.u32 [#allocation5], 4
      %s84 = int_to_ptr.vmem [resolvable:$true] %s83
      %s85 = sshll.u32 %s1, 4
      %s86 = int_to_ptr.hbm [resolvable:$true] %s85
      %88 = dma.vmem_to_hbm [thread:$0]  %s84, 128, %s86, [#allocation4]
    $region13: #{tpu_custom_call.1} parent=1 // pred_fallthru
      _
    // Predicated region
    $region14: #{tpu_custom_call.1} parent=1 // pred_check
      _
    $region15: #{tpu_custom_call.1} parent=1 // pred_check_branch
      %90 = sbr.rel (0) target = $region17
    $region16: #{tpu_custom_call.1} parent=1 // pred_region
      %92 = dma.done [#allocation4], 128
    $region17: #{tpu_custom_call.1} parent=1 // pred_fallthru
      _
    %93 = vsyncpa [#allocation3], 1
    %94 = vsyncpa [#allocation4], 1

</llo_original>
